<compile_context>
chip_gen: v7x
topology: tpu7x:2x2x1
jax: 0.10.0
libtpu: 0.0.40
codegen_flags: <defaults>
</compile_context>

<pallas_src>
import functools
from typing import NamedTuple

import jax
import jax.numpy as jnp
from jax.experimental import pallas as pl
from jax.experimental.pallas import tpu as pltpu


# --------------------------------------------------------------------------- #
# chip / feature detection (import time, cheap)
# --------------------------------------------------------------------------- #
def _device_kind():
    try:
        return jax.devices()[0].device_kind.lower()
    except Exception:
        return ""


_KIND = _device_kind()


def _vmem_capacity_bytes():
    try:
        info = pltpu.get_tpu_info()
        cap = getattr(info, "vmem_capacity_bytes", None)
        if cap:
            return int(cap)
    except Exception:
        pass
    return (64 if "v7" in _KIND else 128) * 1024 * 1024


_VMEM_CAP = _vmem_capacity_bytes()
_BIG_VMEM = _VMEM_CAP >= 100 * 1024 * 1024            # 128 MiB parts (v5e/v6e)
_LANE_ALIGN = 256 if ("v6" in _KIND or "v7" in _KIND) else 128   # MXU K/N alignment
_NUM_TC = 2 if "v7" in _KIND else 1                   # v7x: 2 TensorCores / chip

_PAR = pltpu.PARALLEL if hasattr(pltpu, "PARALLEL") else "parallel"
_ARB = pltpu.ARBITRARY if hasattr(pltpu, "ARBITRARY") else "arbitrary"


def _probe_buffered_kwarg():
    """Determine pl.Buffered support once at import time (no per-call try/retrace)."""
    if not hasattr(pl, "Buffered"):
        return False
    try:
        pl.BlockSpec((8, 128), lambda i: (0, 0), pipeline_mode=pl.Buffered(1))
        return True
    except TypeError:
        return False


_BUFFERED_KWARG = _probe_buffered_kwarg()

# Flip to True only if profiling shows the sigmoid epilogue on the critical path
# (EUP approx reciprocal trades ~1e-4 relative error for a free EUP slot).
_APPROX_SIGMOID = False


def _round_up(x, m):
    return ((x + m - 1) // m) * m


def _pick_dividing_tile(total, align, max_tile):
    """Largest multiple of `align` that divides `total` and is <= max_tile."""
    best = align
    t = align
    while t <= min(max_tile, total):
        if total % t == 0:
            best = t
        t += align
    return best


def _resident_spec(block_shape, index_map, single_buffer):
    """BlockSpec for a grid-resident operand (constant index map). pl.Buffered(1)
    keeps a single VMEM copy instead of the default double buffer."""
    if single_buffer and _BUFFERED_KWARG:
        return pl.BlockSpec(block_shape, index_map, pipeline_mode=pl.Buffered(1))
    return pl.BlockSpec(block_shape, index_map)


def _sigmoid(y):
    # exp on the EUP; reciprocal exact by default (approx flag frees VALU bundles).
    return pl.reciprocal(1.0 + jnp.exp(-y), approx=_APPROX_SIGMOID)


# --------------------------------------------------------------------------- #
# Kernels
# --------------------------------------------------------------------------- #
def _mlp_fused_kernel(x_ref, w1_ref, b1_ref, w2_ref, b2_ref, o_ref, *, n_chunks):
    """Whole (hidden-chunked) weights resident in VMEM; grid = (batch tiles,).
    The hidden dim is walked chunk-by-chunk so the full (tile_b, hid_p) activation
    is never materialized; fc2 output is accumulated in f32."""
    x = x_ref[...]                                     # MXU compute dtype, no upcast
    f_out = o_ref.shape[-1]

    def chunk(c, acc):
        h = jnp.dot(x, w1_ref[c], preferred_element_type=jnp.float32)
        h = jnp.maximum(h + b1_ref[c], 0.0)            # fc1 bias + ReLU in f32 (VPU)
        h = h.astype(w2_ref.dtype)                     # back to MXU dtype
        return acc + jnp.dot(h, w2_ref[c], preferred_element_type=jnp.float32)

    acc0 = jnp.zeros((x.shape[0], f_out), jnp.float32)
    if n_chunks == 1:
        acc = chunk(0, acc0)
    else:
        acc = jax.lax.fori_loop(0, n_chunks, chunk, acc0, unroll=(n_chunks <= 8))

    y = acc + b2_ref[...]                              # fc2 bias in f32
    o_ref[...] = _sigmoid(y).astype(o_ref.dtype)


def _mlp_htiled_kernel(x_ref, w1_ref, b1_ref, w2_ref, b2_ref, o_ref, acc_ref):
    """Large-layer path: grid = (batch tiles, hidden chunks).  fc2's output is
    accumulated over hidden chunks in an f32 VMEM scratch; bias2 + sigmoid are
    applied exactly once, in the pl.when finalize on the last hidden step."""
    k = pl.program_id(1)

    @pl.when(k == 0)
    def _init():
        acc_ref[...] = jnp.zeros_like(acc_ref)

    h = jnp.dot(x_ref[...], w1_ref[...], preferred_element_type=jnp.float32)
    h = jnp.maximum(h + b1_ref[...], 0.0).astype(w2_ref.dtype)
    acc_ref[...] += jnp.dot(h, w2_ref[...], preferred_element_type=jnp.float32)

    @pl.when(k == pl.num_programs(1) - 1)
    def _finalize():
        y = acc_ref[...] + b2_ref[...]
        o_ref[...] = _sigmoid(y).astype(o_ref.dtype)


# --------------------------------------------------------------------------- #
# One-time parameter preparation (hoisted glue; cache the result)
# --------------------------------------------------------------------------- #
class PreparedMLP(NamedTuple):
    w1: jax.Array          # [n_chunks, f_in, tile_h]     compute dtype
    b1: jax.Array          # [n_chunks, 1, tile_h]        f32
    w2: jax.Array          # [n_chunks, tile_h, f_out_p]  compute dtype
    b2: jax.Array          # [1, f_out_p]                 f32
    f_in: int
    hid: int
    f_out: int
    hid_p: int
    f_out_p: int
    tile_h: int
    n_chunks: int
    compute_dtype: object


def prepare_mlp_params(w1, b1, w2, b2, *, compute_dtype=jnp.float32,
                       lane_align=None, max_chunk=512):
    """Transpose PyTorch [out, in] weights to [in, out], zero-pad hidden/output
    feature dims to the MXU lane alignment (lane-dense stores, no vst.msk), cast to
    the MXU compute dtype and pre-chunk the hidden dim.  Call once, reuse."""
    if lane_align is None:
        lane_align = _LANE_ALIGN
    compute_dtype = jax.dtypes.canonicalize_dtype(compute_dtype)

    w1 = jnp.asarray(w1)
    w2 = jnp.asarray(w2)
    hid, f_in = w1.shape
    f_out = w2.shape[0]

    hid_p = _round_up(hid, lane_align)
    f_out_p = _round_up(f_out, lane_align)
    tile_h = _pick_dividing_tile(hid_p, lane_align, max_chunk)   # divides hid_p exactly
    n_chunks = hid_p // tile_h

    w1_t = jnp.pad(w1.T.astype(compute_dtype), ((0, 0), (0, hid_p - hid)))
    w2_t = jnp.pad(w2.T.astype(compute_dtype),
                   ((0, hid_p - hid), (0, f_out_p - f_out)))
    b1_p = jnp.pad(jnp.asarray(b1).astype(jnp.float32), (0, hid_p - hid))
    b2_p = jnp.pad(jnp.asarray(b2).astype(jnp.float32), (0, f_out_p - f_out))

    # chunk the hidden dim: [f_in, hid_p] -> [n_chunks, f_in, tile_h] etc.
    w1_c = jnp.transpose(w1_t.reshape(f_in, n_chunks, tile_h), (1, 0, 2))
    b1_c = b1_p.reshape(n_chunks, 1, tile_h)
    w2_c = w2_t.reshape(n_chunks, tile_h, f_out_p)
    b2_c = b2_p.reshape(1, f_out_p)

    return PreparedMLP(w1_c, b1_c, w2_c, b2_c, f_in, hid, f_out, hid_p, f_out_p,
                       tile_h, n_chunks, compute_dtype)


# --------------------------------------------------------------------------- #
# Wrapper
# --------------------------------------------------------------------------- #
def mlp_forward(x, w1=None, b1=None, w2=None, b2=None, *, params=None,
                compute_dtype=None, _force_htiled=False):
    """Single-device MLP forward.

    x : [..., in_features]
    w1: [hiddens, in_features]   b1: [hiddens]        (PyTorch Linear layout)
    w2: [out_features, hiddens]  b2: [out_features]
    Pass a cached `params=prepare_mlp_params(...)` to skip the per-call glue.
    """
    x = jnp.asarray(x)
    orig_shape = x.shape
    f_in = orig_shape[-1]
    x2d = x.reshape(-1, f_in)
    batch = x2d.shape[0]

    if params is None:
        params = prepare_mlp_params(
            w1, b1, w2, b2,
            compute_dtype=(x2d.dtype if compute_dtype is None else compute_dtype))
    p = params
    assert p.f_in == f_in, "input feature dim mismatch"

    cdt = p.compute_dtype
    isz = jnp.dtype(cdt).itemsize
    x_c = x2d.astype(cdt)

    cap = _VMEM_CAP
    budget = int((0.85 if _BIG_VMEM else 0.70) * cap)
    act_budget = (24 if _BIG_VMEM else 10) * 1024 * 1024
    tile_b_cap = 1024 if _BIG_VMEM else 512
    row_mult = 8 * max(1, 4 // isz)          # sublane packing: f32 -> 8, bf16 -> 16
    wf = 1 if _BUFFERED_KWARG else 2         # resident-weight buffer count

    # ---- batch tile ---------------------------------------------------------
    per_row = (2 * f_in * isz                # x double buffer
               + 2 * p.f_out_p * isz         # out double buffer
               + p.tile_h * (4 + isz)        # one hidden chunk (f32 + MXU recast)
               + p.f_out_p * 4)              # f32 accumulator
    tile_b = min(tile_b_cap,
                 max(row_mult, (act_budget // per_row) // row_mult * row_mult))
    if batch <= tile_b:
        tile_b = batch
        # only split on 2-TensorCore parts (serial grid splits just add overhead)
        if _NUM_TC > 1 and batch >= 2 * row_mult and batch % (2 * row_mult) == 0:
            tile_b = batch // 2

    batch_p = _round_up(batch, tile_b)
    if batch_p != batch:                     # full tiles only: no garbage rows in flight
        x_c = jnp.pad(x_c, ((0, batch_p - batch), (0, 0)))
    grid_b = batch_p // tile_b

    if _NUM_TC > 1 and grid_b >= 2 and hasattr(pltpu, "CORE_PARALLEL"):
        batch_sem = pltpu.CORE_PARALLEL      # actually shards across v7x's 2 TCs
    else:
        batch_sem = _PAR

    def _vmem_limit(plan_bytes):
        return int(min(0.9 * cap, max(plan_bytes * 1.4, 48 * 1024 * 1024)))

    # ---- plan: fused (weights resident) vs hidden-tiled grid ---------------
    resident_w_bytes = wf * ((p.n_chunks * f_in * p.tile_h
                              + p.n_chunks * p.tile_h * p.f_out_p) * isz
                             + (p.hid_p + p.f_out_p) * 4)
    fused_bytes = resident_w_bytes + tile_b * per_row
    use_fused = (fused_bytes <= budget) and not _force_htiled

    out_shape = jax.ShapeDtypeStruct((batch_p, p.f_out_p), cdt)

    if use_fused:
        kernel = functools.partial(_mlp_fused_kernel, n_chunks=p.n_chunks)

        def build(single_buffer):
            return pl.pallas_call(
                kernel,
                out_shape=out_shape,
                grid_spec=pltpu.PrefetchScalarGridSpec(
                    num_scalar_prefetch=0,
                    grid=(grid_b,),
                    in_specs=[
                        pl.BlockSpec((tile_b, f_in), lambda i: (i, 0)),
                        _resident_spec((p.n_chunks, f_in, p.tile_h),
                                       lambda i: (0, 0, 0), single_buffer),
                        _resident_spec((p.n_chunks, 1, p.tile_h),
                                       lambda i: (0, 0, 0), single_buffer),
                        _resident_spec((p.n_chunks, p.tile_h, p.f_out_p),
                                       lambda i: (0, 0, 0), single_buffer),
                        _resident_spec((1, p.f_out_p), lambda i: (0, 0),
                                       single_buffer),
                    ],
                    out_specs=pl.BlockSpec((tile_b, p.f_out_p), lambda i: (i, 0)),
                ),
                compiler_params=pltpu.CompilerParams(
                    dimension_semantics=(batch_sem,),
                    vmem_limit_bytes=_vmem_limit(fused_bytes)),
            )
    else:
        htiled_bytes = (tile_b * per_row
                        + 2 * (f_in * p.tile_h + p.tile_h * p.f_out_p) * isz
                        + 2 * p.tile_h * 4
                        + wf * p.f_out_p * 4)
        kernel = _mlp_htiled_kernel

        def build(single_buffer):
            return pl.pallas_call(
                kernel,
                out_shape=out_shape,
                grid_spec=pltpu.PrefetchScalarGridSpec(
                    num_scalar_prefetch=0,
                    grid=(grid_b, p.n_chunks),
                    in_specs=[
                        pl.BlockSpec((tile_b, f_in), lambda i, k: (i, 0)),
                        pl.BlockSpec((None, f_in, p.tile_h), lambda i, k: (k, 0, 0)),
                        pl.BlockSpec((None, 1, p.tile_h), lambda i, k: (k, 0, 0)),
                        pl.BlockSpec((None, p.tile_h, p.f_out_p),
                                     lambda i, k: (k, 0, 0)),
                        _resident_spec((1, p.f_out_p), lambda i, k: (0, 0),
                                       single_buffer),
                    ],
                    out_specs=pl.BlockSpec((tile_b, p.f_out_p), lambda i, k: (i, 0)),
                    scratch_shapes=[pltpu.VMEM((tile_b, p.f_out_p), jnp.float32)],
                ),
                compiler_params=pltpu.CompilerParams(
                    dimension_semantics=(batch_sem, _ARB),
                    vmem_limit_bytes=_vmem_limit(htiled_bytes)),
            )

    args = (x_c, p.w1, p.b1, p.w2, p.b2)
    if _BUFFERED_KWARG:
        try:
            out_p = build(True)(*args)
        except (TypeError, NotImplementedError, ValueError, pltpu.LoweringException):
            # pl.Buffered(1) rejected by this Mosaic build: fall back to the default
            # double-buffered resident operands (genuine errors resurface here).
            out_p = build(False)(*args)
    else:
        out_p = build(False)(*args)

    out = out_p[:batch, :p.f_out]            # strip batch + lane padding
    return out.reshape(*orig_shape[:-1], p.f_out)


# TODO(synk): the torch.distributed multi-rank branch (row-sharded Linear + gather)
# has no single-kernel equivalent here; only the single-device forward is implemented.

if __name__ == "__main__":
    batch, in_features, hiddens, out_features = 8, 16, 32, 8

    key = jax.random.PRNGKey(0)
    kx, kw1, kb1, kw2, kb2 = jax.random.split(key, 5)

    x = jax.random.normal(kx, (batch, in_features), dtype=jnp.float32)

    # PyTorch-Linear-style init (uniform in +-1/sqrt(fan_in)), PyTorch [out,in] layout.
    lim1 = 1.0 / jnp.sqrt(float(in_features))
    lim2 = 1.0 / jnp.sqrt(float(hiddens))
    w1 = jax.random.uniform(kw1, (hiddens, in_features), jnp.float32, -lim1, lim1)
    b1 = jax.random.uniform(kb1, (hiddens,), jnp.float32, -lim1, lim1)
    w2 = jax.random.uniform(kw2, (out_features, hiddens), jnp.float32, -lim2, lim2)
    b2 = jax.random.uniform(kb2, (out_features,), jnp.float32, -lim2, lim2)

    # Pure-JAX reference.
    ref_h = jnp.maximum(x @ w1.T + b1, 0.0)
    ref = jax.nn.sigmoid(ref_h @ w2.T + b2)

    # 1) f32 fused path, params prepared once (hoisted glue) and reused.
    params_f32 = prepare_mlp_params(w1, b1, w2, b2, compute_dtype=jnp.float32)
    out = jax.block_until_ready(mlp_forward(x, params=params_f32))
    assert out.shape == (batch, out_features)
    assert jnp.allclose(out, ref, atol=1e-5, rtol=1e-5), "fused f32 mismatch"
    out2 = jax.block_until_ready(mlp_forward(x, params=params_f32))   # cached reuse
    assert jnp.allclose(out2, ref, atol=1e-5, rtol=1e-5)

    # 2) bf16 MXU operands, f32 accumulation.
    params_bf16 = prepare_mlp_params(w1, b1, w2, b2, compute_dtype=jnp.bfloat16)
    out_bf16 = jax.block_until_ready(mlp_forward(x, params=params_bf16))
    assert out_bf16.shape == (batch, out_features)
    assert jnp.allclose(out_bf16.astype(jnp.float32), ref, atol=5e-2, rtol=0)

    # 3) hidden-tiled accumulator path (large-layer fallback), forced for coverage.
    out_tiled = jax.block_until_ready(
        mlp_forward(x, w1, b1, w2, b2, _force_htiled=True))
    assert jnp.allclose(out_tiled, ref, atol=1e-5, rtol=1e-5), "htiled mismatch"

    # 4) multi-chunk fused path (hidden walked in-kernel), forced small chunk width.
    big_hid = 512
    kw1b, kw2b = jax.random.split(kw1)
    w1b = jax.random.uniform(kw1b, (big_hid, in_features), jnp.float32, -lim1, lim1)
    b1b = jnp.zeros((big_hid,), jnp.float32)
    w2b = jax.random.uniform(kw2b, (out_features, big_hid), jnp.float32, -lim2, lim2)
    refb = jax.nn.sigmoid(jnp.maximum(x @ w1b.T + b1b, 0.0) @ w2b.T + b2)
    params_chunk = prepare_mlp_params(w1b, b1b, w2b, b2, compute_dtype=jnp.float32,
                                      max_chunk=_LANE_ALIGN)   # forces n_chunks >= 2
    out_chunk = jax.block_until_ready(mlp_forward(x, params=params_chunk))
    assert jnp.allclose(out_chunk, refb, atol=1e-4, rtol=1e-4), "chunked fused mismatch"

    print("KERNEL_OK")
</pallas_src>

<mosaic_0001>
module attributes {stable_mosaic.version = 11 : i64} {
  func.func @_mlp_fused_kernel(%arg0: i32, %arg1: memref<8x16xf32, #tpu.memory_space<vmem>>, %arg2: memref<1x16x128xf32, #tpu.memory_space<vmem>>, %arg3: memref<1x1x128xf32, #tpu.memory_space<vmem>>, %arg4: memref<1x128x128xf32, #tpu.memory_space<vmem>>, %arg5: memref<1x128xf32, #tpu.memory_space<vmem>>, %arg6: memref<8x128xf32, #tpu.memory_space<vmem>>) attributes {dimension_semantics = [#tpu.dimension_semantics<parallel>], iteration_bounds = array<i64: 1>, scalar_prefetch = 0 : i64, scratch_operands = 0 : i64, tpu.core_type = #tpu.core_type<tc>, window_params = [{transform_indices = @transform_0, window_bounds = array<i64: 8, 16>}, {pipeline_mode = #tpu.pipeline_mode<synchronous>, transform_indices = @transform_1, window_bounds = array<i64: 1, 16, 128>}, {pipeline_mode = #tpu.pipeline_mode<synchronous>, transform_indices = @transform_2, window_bounds = array<i64: 1, 1, 128>}, {pipeline_mode = #tpu.pipeline_mode<synchronous>, transform_indices = @transform_3, window_bounds = array<i64: 1, 128, 128>}, {pipeline_mode = #tpu.pipeline_mode<synchronous>, transform_indices = @transform_4, window_bounds = array<i64: 1, 128>}, {transform_indices = @transform_5, window_bounds = array<i64: 8, 128>}]} {
    %c0 = arith.constant 0 : index
    %c0_0 = arith.constant 0 : index
    %0 = vector.load %arg1[%c0, %c0_0] : memref<8x16xf32, #tpu.memory_space<vmem>>, vector<8x16xf32>
    %cst = arith.constant 0.000000e+00 : f32
    %1 = vector.broadcast %cst : f32 to vector<8x128xf32>
    %c0_1 = arith.constant 0 : index
    %c0_2 = arith.constant 0 : index
    %c0_3 = arith.constant 0 : index
    %2 = vector.load %arg2[%c0_1, %c0_2, %c0_3] : memref<1x16x128xf32, #tpu.memory_space<vmem>>, vector<1x16x128xf32>
    %3 = vector.shape_cast %2 : vector<1x16x128xf32> to vector<16x128xf32>
    %cst_4 = arith.constant dense<0.000000e+00> : vector<8x128xf32>
    %4 = tpu.matmul %0, %3, %cst_4 {dimension_numbers = #tpu.dot_dimension_numbers<[1], [0], [0], [1], [0, 0, 1, 1], [], []>} : vector<8x16xf32>, vector<16x128xf32>, vector<8x128xf32> -> vector<8x128xf32>
    %c0_5 = arith.constant 0 : index
    %c0_6 = arith.constant 0 : index
    %c0_7 = arith.constant 0 : index
    %5 = vector.load %arg3[%c0_5, %c0_6, %c0_7] : memref<1x1x128xf32, #tpu.memory_space<vmem>>, vector<1x1x128xf32>
    %6 = vector.shape_cast %5 : vector<1x1x128xf32> to vector<1x128xf32>
    %7 = vector.broadcast %6 : vector<1x128xf32> to vector<8x128xf32>
    %8 = arith.addf %4, %7 : vector<8x128xf32>
    %cst_8 = arith.constant 0.000000e+00 : f32
    %9 = vector.broadcast %cst_8 : f32 to vector<8x128xf32>
    %10 = arith.maximumf %8, %9 : vector<8x128xf32>
    %c0_9 = arith.constant 0 : index
    %c0_10 = arith.constant 0 : index
    %c0_11 = arith.constant 0 : index
    %11 = vector.load %arg4[%c0_9, %c0_10, %c0_11] : memref<1x128x128xf32, #tpu.memory_space<vmem>>, vector<1x128x128xf32>
    %12 = vector.shape_cast %11 : vector<1x128x128xf32> to vector<128x128xf32>
    %cst_12 = arith.constant dense<0.000000e+00> : vector<8x128xf32>
    %13 = tpu.matmul %10, %12, %cst_12 {dimension_numbers = #tpu.dot_dimension_numbers<[1], [0], [0], [1], [0, 0, 1, 1], [], []>} : vector<8x128xf32>, vector<128x128xf32>, vector<8x128xf32> -> vector<8x128xf32>
    %14 = arith.addf %1, %13 : vector<8x128xf32>
    %c0_13 = arith.constant 0 : index
    %c0_14 = arith.constant 0 : index
    %15 = vector.load %arg5[%c0_13, %c0_14] : memref<1x128xf32, #tpu.memory_space<vmem>>, vector<1x128xf32>
    %16 = vector.broadcast %15 : vector<1x128xf32> to vector<8x128xf32>
    %17 = arith.addf %14, %16 : vector<8x128xf32>
    %cst_15 = arith.constant 0.000000e+00 : f32
    %18 = vector.broadcast %cst_15 : f32 to vector<8x128xf32>
    %19 = arith.subf %18, %17 : vector<8x128xf32>
    %20 = math.exp %19 : vector<8x128xf32>
    %cst_16 = arith.constant 1.000000e+00 : f32
    %21 = vector.broadcast %cst_16 : f32 to vector<8x128xf32>
    %22 = arith.addf %21, %20 : vector<8x128xf32>
    %23 = tpu.reciprocal %22 : vector<8x128xf32> -> vector<8x128xf32>
    %c0_17 = arith.constant 0 : index
    %c0_18 = arith.constant 0 : index
    %24 = vector.load %arg6[%c0_17, %c0_18] : memref<8x128xf32, #tpu.memory_space<vmem>>, vector<8x128xf32>
    tpu.vector_store %arg6[%c0_17, %c0_18], %23 {strides = array<i32>} : memref<8x128xf32, #tpu.memory_space<vmem>>, vector<8x128xf32>,
    return
  }
  func.func @transform_0(%arg0: i32) -> (i32, i32) {
    %c0_i32 = arith.constant 0 : i32
    %c0_i32_0 = arith.constant 0 : i32
    return %arg0, %c0_i32 : i32, i32
  }
  func.func @transform_1(%arg0: i32) -> (i32, i32, i32) {
    %c0_i32 = arith.constant 0 : i32
    %c0_i32_0 = arith.constant 0 : i32
    %c0_i32_1 = arith.constant 0 : i32
    %c0_i32_2 = arith.constant 0 : i32
    return %c0_i32, %c0_i32_0, %c0_i32_1 : i32, i32, i32
  }
  func.func @transform_2(%arg0: i32) -> (i32, i32, i32) {
    %c0_i32 = arith.constant 0 : i32
    %c0_i32_0 = arith.constant 0 : i32
    %c0_i32_1 = arith.constant 0 : i32
    %c0_i32_2 = arith.constant 0 : i32
    return %c0_i32, %c0_i32_0, %c0_i32_1 : i32, i32, i32
  }
  func.func @transform_3(%arg0: i32) -> (i32, i32, i32) {
    %c0_i32 = arith.constant 0 : i32
    %c0_i32_0 = arith.constant 0 : i32
    %c0_i32_1 = arith.constant 0 : i32
    %c0_i32_2 = arith.constant 0 : i32
    return %c0_i32, %c0_i32_0, %c0_i32_1 : i32, i32, i32
  }
  func.func @transform_4(%arg0: i32) -> (i32, i32) {
    %c0_i32 = arith.constant 0 : i32
    %c0_i32_0 = arith.constant 0 : i32
    %c0_i32_1 = arith.constant 0 : i32
    return %c0_i32, %c0_i32_0 : i32, i32
  }
  func.func @transform_5(%arg0: i32) -> (i32, i32) {
    %c0_i32 = arith.constant 0 : i32
    %c0_i32_0 = arith.constant 0 : i32
    return %arg0, %c0_i32 : i32, i32
  }
}

</mosaic_0001>

<llo_original>
// kernel: tpu_custom_call.1
$region0: #{tpu_custom_call.1}
  #allocation0 [shape = 'u32[]', space=smem, size = 0x4, offset = 0x4, fixed_abs, tag = 'smem constant byte address 0x4 - core index']
  #allocation1 [shape = 'u32[144,128]{1,0:T(1,128)}', space=vmem, size = 0x12000, scoped, tag = 'internal scratch']
  %s0 = inlined_call_operand.hbm [shape: f32[8,16], index: 0, kind: input, shape index: {}]
  %s1 = inlined_call_operand.hbm [shape: f32[1,16,128], index: 1, kind: input, shape index: {}]
  %s2 = inlined_call_operand.vmem [shape: f32[1,1,128], index: 2, kind: input, shape index: {}]
  %s3 = inlined_call_operand.hbm [shape: f32[1,128,128], index: 3, kind: input, shape index: {}]
  %s4 = inlined_call_operand.vmem [shape: f32[1,128], index: 4, kind: input, shape index: {}]
  %s5 = inlined_call_operand.hbm [shape: f32[8,128], index: 5, kind: output, shape index: {}]
  %s6 = sld [smem:[#allocation0]]
  $region42: #{tpu_custom_call.1} parent=0
    _
  %s8 = ssub.s32 1, %s6
  %s9 = scalar_select 0, %s8, %s6
  $region1: #{tpu_custom_call.1} parent=0
    #allocation2 [shape = 'u8[4096]{0}', space=vmem, size = 0x1000, scoped, tag = 'input window, operand 0, single buffered']
    #allocation3 [shape = 's32[1]{0}', space=sflag, size = 0x4, scoped, tag = 'scoped memory for tpu_custom_call.1']
    #allocation4 [shape = 's32[1]{0}', space=sflag, size = 0x4, scoped, tag = 'scoped memory for tpu_custom_call.1']
    #allocation5 [shape = 'u8[8192]{0}', space=vmem, size = 0x2000, scoped, tag = 'input window, operand 1, single buffered']
    #allocation6 [shape = 's32[1]{0}', space=sflag, size = 0x4, scoped, tag = 'scoped memory for tpu_custom_call.1']
    #allocation7 [shape = 'u8[65536]{0}', space=vmem, size = 0x10000, scoped, tag = 'input window, operand 3, single buffered']
    #allocation8 [shape = 'u8[4096]{0}', space=vmem, size = 0x1000, scoped, tag = 'output window, operand 0, single buffered']
    %10 = vsyncpa [#allocation3], 0
    %11 = vsyncpa [#allocation6], 0
    %12 = vsyncpa [#allocation4], 0
    // Predicated region
    $region2: #{tpu_custom_call.1} parent=1 // pred_check
      _
    $region3: #{tpu_custom_call.1} parent=1 // pred_check_branch
      %14 = sbr.rel (0) target = $region5
    $region4: #{tpu_custom_call.1} parent=1 // pred_region
      %s16 = ssub.s32 128, 128
      %17 = vsyncadd [#allocation3], %s16
      %s19 = sshll.u32 [#allocation2], 4
      %s20 = int_to_ptr.vmem [resolvable:$true] %s19
      %22 = dma.hbm_to_vmem [thread:$0]  %s0, 128, %s20, [#allocation3]
    $region5: #{tpu_custom_call.1} parent=1 // pred_fallthru
      _
    // Predicated region
    $region6: #{tpu_custom_call.1} parent=1 // pred_check
      _
    $region7: #{tpu_custom_call.1} parent=1 // pred_check_branch
      %24 = sbr.rel (0) target = $region9
    $region8: #{tpu_custom_call.1} parent=1 // pred_region
      %s26 = ssub.s32 256, 256
      %27 = vsyncadd [#allocation6], %s26
      %s28 = sshll.u32 [#allocation5], 4
      %s29 = int_to_ptr.vmem [resolvable:$true] %s28
      %34 = dma.hbm_to_vmem [thread:$0]  %s1, 256, %s29, [#allocation6], 128, 128, 8
    $region9: #{tpu_custom_call.1} parent=1 // pred_fallthru
      _
    // Predicated region
    $region10: #{tpu_custom_call.1} parent=1 // pred_check
      _
    $region11: #{tpu_custom_call.1} parent=1 // pred_check_branch
      %36 = sbr.rel (0) target = $region13
    $region12: #{tpu_custom_call.1} parent=1 // pred_region
      _
    $region13: #{tpu_custom_call.1} parent=1 // pred_fallthru
      _
    // Predicated region
    $region14: #{tpu_custom_call.1} parent=1 // pred_check
      _
    $region15: #{tpu_custom_call.1} parent=1 // pred_check_branch
      %38 = sbr.rel (0) target = $region17
    $region16: #{tpu_custom_call.1} parent=1 // pred_region
      %s40 = ssub.s32 2048, 2048
      %41 = vsyncadd [#allocation6], %s40
      %s42 = sshll.u32 [#allocation7], 4
      %s43 = int_to_ptr.vmem [resolvable:$true] %s42
      %48 = dma.hbm_to_vmem [thread:$0]  %s3, 2048, %s43, [#allocation6], 128, 128, 8
    $region17: #{tpu_custom_call.1} parent=1 // pred_fallthru
      _
    // Predicated region
    $region18: #{tpu_custom_call.1} parent=1 // pred_check
      _
    $region19: #{tpu_custom_call.1} parent=1 // pred_check_branch
      %50 = sbr.rel (0) target = $region21
    $region20: #{tpu_custom_call.1} parent=1 // pred_region
      _
    $region21: #{tpu_custom_call.1} parent=1 // pred_fallthru
      _
    // Predicated region
    $region22: #{tpu_custom_call.1} parent=1 // pred_check
      _
    $region23: #{tpu_custom_call.1} parent=1 // pred_check_branch
      %52 = sbr.rel (0) target = $region25
    $region24: #{tpu_custom_call.1} parent=1 // pred_region
      %53 = dma.done [#allocation3], 128
    $region25: #{tpu_custom_call.1} parent=1 // pred_fallthru
      _
    // Predicated region
    $region26: #{tpu_custom_call.1} parent=1 // pred_check
      _
    $region27: #{tpu_custom_call.1} parent=1 // pred_check_branch
      %55 = sbr.rel (0) target = $region29
    $region28: #{tpu_custom_call.1} parent=1 // pred_region
      %56 = dma.done [#allocation6], 256
    $region29: #{tpu_custom_call.1} parent=1 // pred_fallthru
      _
    // Predicated region
    $region30: #{tpu_custom_call.1} parent=1 // pred_check
      _
    $region31: #{tpu_custom_call.1} parent=1 // pred_check_branch
      %58 = sbr.rel (0) target = $region33
    $region32: #{tpu_custom_call.1} parent=1 // pred_region
      %59 = dma.done [#allocation6], 2048
    $region33: #{tpu_custom_call.1} parent=1 // pred_fallthru
      _
    %v60 = vld [vmem:[#allocation2] sm:$0xff]
    %v61 = vld [vmem:[#allocation5] sm:$0xff]
    %v62 = vld [vmem:[#allocation5 + $0x8] sm:$0xff]
    %v63 = vld [vmem:[%s2] sm:$0x1]
    %v65 = vlaneseq
    %v66 = vshrl.u32 %v65, 7
    %v67 = vsub.s32 0, %v66
    %v68 = vrot.slane %v63, %v67
    %vm70 = vcmask 130048
    %v72 = vsel %vm70, %v60, 0
    %74 = vmatprep.subr.mxu0 0.0
    %75 = vmatpush1.msra.mxu0 %v61
    %76 = vmatprep.subr.mxu0 0.0
    %77 = vmatpush1.msra.mxu0 %v62
    %78 = vmatprep.subr.mxu0 0.0
    %79 = vmatpush1.msra.mxu0 0.0
    %80 = vmatprep.subr.mxu0 0.0
    %81 = vmatpush1.msra.mxu0 0.0
    %82 = vmatprep.subr.mxu0 0.0
    %83 = vmatpush1.msra.mxu0 0.0
    %84 = vmatprep.subr.mxu0 0.0
    %85 = vmatpush1.msra.mxu0 0.0
    %86 = vmatprep.subr.mxu0 0.0
    %87 = vmatpush1.msra.mxu0 0.0
    %88 = vmatprep.subr.mxu0 0.0
    %89 = vmatpush1.msra.mxu0 0.0
    %90 = vmatprep.subr.mxu0 0.0
    %91 = vmatpush1.msra.mxu0 0.0
    %92 = vmatprep.subr.mxu0 0.0
    %93 = vmatpush1.msra.mxu0 0.0
    %94 = vmatprep.subr.mxu0 0.0
    %95 = vmatpush1.msra.mxu0 0.0
    %96 = vmatprep.subr.mxu0 0.0
    %97 = vmatpush1.msra.mxu0 0.0
    %98 = vmatprep.subr.mxu0 0.0
    %99 = vmatpush1.msra.mxu0 0.0
    %100 = vmatprep.subr.mxu0 0.0
    %101 = vmatpush1.msra.mxu0 0.0
    %102 = vmatprep.subr.mxu0 0.0
    %103 = vmatpush1.msra.mxu0 0.0
    %104 = vmatprep.subr.mxu0 0.0
    %105 = vmatpush1.msra.mxu0 0.0
    %106 = vmatprep.subr.mxu0 0.0
    %107 = vmatpush1.msra.mxu0 0.0
    %108 = vmatprep.subr.mxu0 0.0
    %109 = vmatpush1.msra.mxu0 0.0
    %110 = vmatprep.subr.mxu0 0.0
    %111 = vmatpush1.msra.mxu0 0.0
    %112 = vmatprep.subr.mxu0 0.0
    %113 = vmatpush1.msra.mxu0 0.0
    %114 = vmatprep.subr.mxu0 0.0
    %115 = vmatpush1.msra.mxu0 0.0
    %116 = vmatprep.subr.mxu0 0.0
    %117 = vmatpush1.msra.mxu0 0.0
    %118 = vmatprep.subr.mxu0 0.0
    %119 = vmatpush1.msra.mxu0 0.0
    %120 = vmatprep.subr.mxu0 0.0
    %121 = vmatpush1.msra.mxu0 0.0
    %122 = vmatprep.subr.mxu0 0.0
    %123 = vmatpush1.msra.mxu0 0.0
    %124 = vmatprep.subr.mxu0 0.0
    %125 = vmatpush1.msra.mxu0 0.0
    %126 = vmatprep.subr.mxu0 0.0
    %127 = vmatpush1.msra.mxu0 0.0
    %128 = vmatprep.subr.mxu0 0.0
    %129 = vmatpush1.msra.mxu0 0.0
    %130 = vmatprep.subr.mxu0 0.0
    %131 = vmatpush1.msra.mxu0 0.0
    %132 = vmatprep.subr.mxu0 0.0
    %133 = vmatpush1.msra.mxu0 0.0
    %134 = vmatprep.subr.mxu0 0.0
    %135 = vmatpush1.msra.mxu0 0.0
    %136 = vmatprep.subr.mxu0 0.0
    %137 = vmatpush1.msra.mxu0 0.0
    %138 = vmatprep.mubr.f32.mxu0 0.0
    %139 = vmatmul.mubr.f32.gmra.mrb[0].mxu0 %v72
    %v140 = vpop.f32.mrb[0].mxu0
    %v141 = vadd.f32 %v68, %v140
    %v142 = vpop.f32.mrb[0].mxu0
    %143 = vdwg.mxu0
    %v144 = vmax.f32 %v141, 0.0
    %v145 = vld [vmem:[#allocation7] sm:$0xff]
    %v146 = vld [vmem:[#allocation7 + $0x8] sm:$0xff]
    %v147 = vld [vmem:[#allocation7 + $0x10] sm:$0xff]
    %v148 = vld [vmem:[#allocation7 + $0x18] sm:$0xff]
    %v149 = vld [vmem:[#allocation7 + $0x20] sm:$0xff]
    %v150 = vld [vmem:[#allocation7 + $0x28] sm:$0xff]
    %v151 = vld [vmem:[#allocation7 + $0x30] sm:$0xff]
    %v152 = vld [vmem:[#allocation7 + $0x38] sm:$0xff]
    %v153 = vld [vmem:[#allocation7 + $0x40] sm:$0xff]
    %v154 = vld [vmem:[#allocation7 + $0x48] sm:$0xff]
    %v155 = vld [vmem:[#allocation7 + $0x50] sm:$0xff]
    %v156 = vld [vmem:[#allocation7 + $0x58] sm:$0xff]
    %v157 = vld [vmem:[#allocation7 + $0x60] sm:$0xff]
    %v158 = vld [vmem:[#allocation7 + $0x68] sm:$0xff]
    %v159 = vld [vmem:[#allocation7 + $0x70] sm:$0xff]
    %v160 = vld [vmem:[#allocation7 + $0x78] sm:$0xff]
    %v161 = vld [vmem:[%s4] sm:$0x1]
    %v163 = vlaneseq
    %v164 = vshrl.u32 %v163, 7
    %v165 = vsub.s32 0, %v164
    %v166 = vrot.slane %v161, %v165
    %168 = vmatprep.subr.mxu0 0.0
    %169 = vmatpush1.msra.mxu0 %v145
    %170 = vmatprep.subr.mxu0 0.0
    %171 = vmatpush1.msra.mxu0 %v146
    %172 = vmatprep.subr.mxu0 0.0
    %173 = vmatpush1.msra.mxu0 %v147
    %174 = vmatprep.subr.mxu0 0.0
    %175 = vmatpush1.msra.mxu0 %v148
    %176 = vmatprep.subr.mxu0 0.0
    %177 = vmatpush1.msra.mxu0 %v149
    %178 = vmatprep.subr.mxu0 0.0
    %179 = vmatpush1.msra.mxu0 %v150
    %180 = vmatprep.subr.mxu0 0.0
    %181 = vmatpush1.msra.mxu0 %v151
    %182 = vmatprep.subr.mxu0 0.0
    %183 = vmatpush1.msra.mxu0 %v152
    %184 = vmatprep.subr.mxu0 0.0
    %185 = vmatpush1.msra.mxu0 %v153
    %186 = vmatprep.subr.mxu0 0.0
    %187 = vmatpush1.msra.mxu0 %v154
    %188 = vmatprep.subr.mxu0 0.0
    %189 = vmatpush1.msra.mxu0 %v155
    %190 = vmatprep.subr.mxu0 0.0
    %191 = vmatpush1.msra.mxu0 %v156
    %192 = vmatprep.subr.mxu0 0.0
    %193 = vmatpush1.msra.mxu0 %v157
    %194 = vmatprep.subr.mxu0 0.0
    %195 = vmatpush1.msra.mxu0 %v158
    %196 = vmatprep.subr.mxu0 0.0
    %197 = vmatpush1.msra.mxu0 %v159
    %198 = vmatprep.subr.mxu0 0.0
    %199 = vmatpush1.msra.mxu0 %v160
    %200 = vmatprep.subr.mxu0 0.0
    %201 = vmatpush1.msra.mxu0 0.0
    %202 = vmatprep.subr.mxu0 0.0
    %203 = vmatpush1.msra.mxu0 0.0
    %204 = vmatprep.subr.mxu0 0.0
    %205 = vmatpush1.msra.mxu0 0.0
    %206 = vmatprep.subr.mxu0 0.0
    %207 = vmatpush1.msra.mxu0 0.0
    %208 = vmatprep.subr.mxu0 0.0
    %209 = vmatpush1.msra.mxu0 0.0
    %210 = vmatprep.subr.mxu0 0.0
    %211 = vmatpush1.msra.mxu0 0.0
    %212 = vmatprep.subr.mxu0 0.0
    %213 = vmatpush1.msra.mxu0 0.0
    %214 = vmatprep.subr.mxu0 0.0
    %215 = vmatpush1.msra.mxu0 0.0
    %216 = vmatprep.subr.mxu0 0.0
    %217 = vmatpush1.msra.mxu0 0.0
    %218 = vmatprep.subr.mxu0 0.0
    %219 = vmatpush1.msra.mxu0 0.0
    %220 = vmatprep.subr.mxu0 0.0
    %221 = vmatpush1.msra.mxu0 0.0
    %222 = vmatprep.subr.mxu0 0.0
    %223 = vmatpush1.msra.mxu0 0.0
    %224 = vmatprep.subr.mxu0 0.0
    %225 = vmatpush1.msra.mxu0 0.0
    %226 = vmatprep.subr.mxu0 0.0
    %227 = vmatpush1.msra.mxu0 0.0
    %228 = vmatprep.subr.mxu0 0.0
    %229 = vmatpush1.msra.mxu0 0.0
    %230 = vmatprep.subr.mxu0 0.0
    %231 = vmatpush1.msra.mxu0 0.0
    %232 = vmatprep.mubr.f32.mxu0 0.0
    %233 = vmatmul.mubr.f32.gmra.mrb[0].mxu0 %v144
    %v234 = vpop.f32.mrb[0].mxu0
    %v235 = vadd.f32 %v166, %v234
    %v236 = vpop.f32.mrb[0].mxu0
    %237 = vdwg.mxu0
    %v238 = vsub.f32 0.0, %v235
    %v239 = vmul.f32 %v238, 1.442695
    %v240 = vpow.pop %v239
    %v241 = vadd.f32 %v240, 1.0
    %v242 = vrcp.pop %v241
    %243 = vst [vmem:[#allocation8] sm:$0xff] %v242
    // Predicated region
    $region34: #{tpu_custom_call.1} parent=1 // pred_check
      _
    $region35: #{tpu_custom_call.1} parent=1 // pred_check_branch
      %245 = sbr.rel (0) target = $region37
    $region36: #{tpu_custom_call.1} parent=1 // pred_region
      %s247 = ssub.s32 128, 128
      %248 = vsyncadd [#allocation4], %s247
      %s250 = sshll.u32 [#allocation8], 4
      %s251 = int_to_ptr.vmem [resolvable:$true] %s250
      %253 = dma.vmem_to_hbm [thread:$0]  %s251, 128, %s5, [#allocation4]
    $region37: #{tpu_custom_call.1} parent=1 // pred_fallthru
      _
    // Predicated region
    $region38: #{tpu_custom_call.1} parent=1 // pred_check
      _
    $region39: #{tpu_custom_call.1} parent=1 // pred_check_branch
      %255 = sbr.rel (0) target = $region41
    $region40: #{tpu_custom_call.1} parent=1 // pred_region
      %256 = dma.done [#allocation4], 128
    $region41: #{tpu_custom_call.1} parent=1 // pred_fallthru
      _
    %257 = vsyncpa [#allocation3], 1
    %258 = vsyncpa [#allocation6], 1
    %259 = vsyncpa [#allocation4], 1

</llo_original>
